<compile_context>
chip_gen: v7x
topology: tpu7x:2x2x1
jax: 0.10.0
libtpu: 0.0.40
codegen_flags: <defaults>
</compile_context>

<pallas_src>
import functools

import jax
import jax.numpy as jnp
from jax.experimental import pallas as pl
from jax.experimental.pallas import tpu as pltpu


def _round_up(n, m):
    return ((n + m - 1) // m) * m


def _cdiv(a, b):
    return -(-a // b)


def _mlp_g_kernel(x_ref, w1_ref, b1_ref, w2_ref, b2_ref, w3_ref, b3_ref, o_ref):
    # x arrives in its native dtype (f32); cast to bf16 on the VPU so all
    # matmuls are bf16 x bf16 with f32 accumulation on the MXU.
    x = x_ref[...].astype(jnp.bfloat16)

    h1 = jnp.dot(x, w1_ref[...], preferred_element_type=jnp.float32) + b1_ref[...]
    h1 = jnp.maximum(h1, 0.0).astype(jnp.bfloat16)

    h2 = jnp.dot(h1, w2_ref[...], preferred_element_type=jnp.float32) + b2_ref[...]
    h2 = jnp.maximum(h2, 0.0).astype(jnp.bfloat16)

    out = jnp.dot(h2, w3_ref[...], preferred_element_type=jnp.float32) + b3_ref[...]
    o_ref[...] = out.astype(o_ref.dtype)


@functools.partial(jax.jit, static_argnames=("block_b", "bf16_out"))
def mlp_g_forward(x, params, block_b=1024, bf16_out=False):
    """x: [B, z_size]; params: dict of w1,b1,w2,b2,w3,b3 (float32)."""
    B, z = x.shape
    w1, b1 = params["w1"], params["b1"]  # [z,128],   [1,128]
    w2, b2 = params["w2"], params["b2"]  # [128,128], [1,128]
    w3, b3 = params["w3"], params["b3"]  # [128,g],   [1,g]
    g = w3.shape[1]

    # Lane-dense output: pad the N (g) dim up to a multiple of 128 so stores
    # are unmasked vst. The zero-padded w3/b3 columns contribute exact zeros.
    gp = _round_up(g, 128)

    # ---- batch tiling -------------------------------------------------------
    # Balanced tiles (minimal dead rows); at least 2 grid steps for B >= 32 so
    # v7x's two TensorCores both get work via the "parallel" grid axis.
    row_mult = 16 if B >= 16 else 8
    n_tiles = max(_cdiv(B, block_b), 2 if B >= 32 else 1)
    bb = max(row_mult, _round_up(_cdiv(B, n_tiles), row_mult))

    # Clamp the tile against a conservative double-buffered VMEM budget
    # (safe for v7x's 64 MiB physical VMEM; generous on v5e/v6e's 128 MiB).
    out_bytes = 2 if bf16_out else 4
    per_row = 2 * (z * x.dtype.itemsize) + 2 * (gp * out_bytes) + 2 * 128 * 4
    tile_budget = 28 * 1024 * 1024
    bb_max = max(row_mult, (tile_budget // per_row) // row_mult * row_mult)
    bb = min(bb, bb_max)

    n_tiles = _cdiv(B, bb)
    Bp = n_tiles * bb

    # x goes straight into the kernel (no wrapper cast/pad HBM passes) unless
    # a ragged last batch tile forces a small pad.
    x_in = jnp.pad(x, ((0, Bp - B), (0, 0))) if Bp > B else x

    # Weights: bf16 for the MXU; only w3/b3 need the lane-dense N pad.
    w1b = w1.astype(jnp.bfloat16)            # [z, 128]   (no K pad)
    w2b = w2.astype(jnp.bfloat16)            # [128, 128]
    w3b = w3.astype(jnp.bfloat16)            # [128, g]
    if gp > g:
        w3b = jnp.pad(w3b, ((0, 0), (0, gp - g)))
        b3p = jnp.pad(b3, ((0, 0), (0, gp - g)))
    else:
        b3p = b3

    out_dtype = jnp.bfloat16 if bf16_out else jnp.float32
    full = lambda a: pl.BlockSpec(a.shape, lambda i: (0, 0))  # resident weights

    out = pl.pallas_call(
        _mlp_g_kernel,
        out_shape=jax.ShapeDtypeStruct((Bp, gp), out_dtype),
        grid_spec=pltpu.PrefetchScalarGridSpec(
            num_scalar_prefetch=0,
            grid=(n_tiles,),
            in_specs=[
                pl.BlockSpec((bb, z), lambda i: (i, 0)),  # x tile over batch
                full(w1b), full(b1),
                full(w2b), full(b2),
                full(w3b), full(b3p),
            ],
            out_specs=pl.BlockSpec((bb, gp), lambda i: (i, 0)),
        ),
        compiler_params=pltpu.CompilerParams(
            dimension_semantics=("parallel",),
            vmem_limit_bytes=40 * 1024 * 1024,  # headroom on v7x's 64 MiB VMEM
        ),
    )(x_in, w1b, b1, w2b, b2, w3b, b3p)

    # Only pay for a slice copy when padding was actually added.
    if Bp > B or gp > g:
        out = out[:B, :g]
    if not bf16_out:
        out = out.astype(x.dtype)  # no-op for f32 inputs
    return out


def init_mlp_g_params(key, z_size, gaussian_size):
    """Mimics PyTorch nn.Linear default init: U(-1/sqrt(fan_in), +1/sqrt(fan_in))."""
    def linear(key, fan_in, fan_out):
        kw, kb = jax.random.split(key)
        bound = 1.0 / jnp.sqrt(fan_in)
        w = jax.random.uniform(kw, (fan_in, fan_out), jnp.float32, -bound, bound)
        b = jax.random.uniform(kb, (1, fan_out), jnp.float32, -bound, bound)
        return w, b

    k1, k2, k3 = jax.random.split(key, 3)
    w1, b1 = linear(k1, z_size, 128)
    w2, b2 = linear(k2, 128, 128)
    w3, b3 = linear(k3, 128, gaussian_size)
    return {"w1": w1, "b1": b1, "w2": w2, "b2": b2, "w3": w3, "b3": b3}


def mlp_g_reference(x, p):
    h1 = jnp.maximum(x @ p["w1"] + p["b1"], 0.0)
    h2 = jnp.maximum(h1 @ p["w2"] + p["b2"], 0.0)
    return h2 @ p["w3"] + p["b3"]


if __name__ == "__main__":
    key = jax.random.PRNGKey(0)
    kx, kp = jax.random.split(key)

    batch = 16
    z_size = 32
    gaussian_size = 64

    x = jax.random.normal(kx, (batch, z_size), jnp.float32)
    params = init_mlp_g_params(kp, z_size, gaussian_size)

    out = mlp_g_forward(x, params)
    out = jax.block_until_ready(out)

    ref = mlp_g_reference(x, params)
    assert out.shape == (batch, gaussian_size)
    # bf16 matmul operands (f32 accumulation) -> tolerance ~1e-2 vs f32 reference.
    assert jnp.allclose(out, ref, atol=5e-2, rtol=5e-2), "mismatch vs reference"

    print("KERNEL_OK")
</pallas_src>

<mosaic_0001>
module attributes {stable_mosaic.version = 11 : i64} {
  func.func @_mlp_g_kernel(%arg0: i32, %arg1: memref<16x32xf32, #tpu.memory_space<vmem>>, %arg2: memref<32x128xbf16, #tpu.memory_space<vmem>>, %arg3: memref<1x128xf32, #tpu.memory_space<vmem>>, %arg4: memref<128x128xbf16, #tpu.memory_space<vmem>>, %arg5: memref<1x128xf32, #tpu.memory_space<vmem>>, %arg6: memref<128x128xbf16, #tpu.memory_space<vmem>>, %arg7: memref<1x128xf32, #tpu.memory_space<vmem>>, %arg8: memref<16x128xf32, #tpu.memory_space<vmem>>) attributes {dimension_semantics = [#tpu.dimension_semantics<parallel>], iteration_bounds = array<i64: 1>, scalar_prefetch = 0 : i64, scratch_operands = 0 : i64, tpu.core_type = #tpu.core_type<tc>, window_params = [{transform_indices = @transform_0, window_bounds = array<i64: 16, 32>}, {pipeline_mode = #tpu.pipeline_mode<synchronous>, transform_indices = @transform_1, window_bounds = array<i64: 32, 128>}, {pipeline_mode = #tpu.pipeline_mode<synchronous>, transform_indices = @transform_2, window_bounds = array<i64: 1, 128>}, {pipeline_mode = #tpu.pipeline_mode<synchronous>, transform_indices = @transform_3, window_bounds = array<i64: 128, 128>}, {pipeline_mode = #tpu.pipeline_mode<synchronous>, transform_indices = @transform_4, window_bounds = array<i64: 1, 128>}, {pipeline_mode = #tpu.pipeline_mode<synchronous>, transform_indices = @transform_5, window_bounds = array<i64: 128, 128>}, {pipeline_mode = #tpu.pipeline_mode<synchronous>, transform_indices = @transform_6, window_bounds = array<i64: 1, 128>}, {transform_indices = @transform_7, window_bounds = array<i64: 16, 128>}]} {
    %c0 = arith.constant 0 : index
    %c0_0 = arith.constant 0 : index
    %0 = vector.load %arg1[%c0, %c0_0] : memref<16x32xf32, #tpu.memory_space<vmem>>, vector<16x32xf32>
    %1 = arith.truncf %0 : vector<16x32xf32> to vector<16x32xbf16>
    %c0_1 = arith.constant 0 : index
    %c0_2 = arith.constant 0 : index
    %2 = vector.load %arg2[%c0_1, %c0_2] : memref<32x128xbf16, #tpu.memory_space<vmem>>, vector<32x128xbf16>
    %cst = arith.constant dense<0.000000e+00> : vector<16x128xf32>
    %3 = tpu.matmul %1, %2, %cst {dimension_numbers = #tpu.dot_dimension_numbers<[1], [0], [0], [1], [0, 0, 1, 1], [], []>} : vector<16x32xbf16>, vector<32x128xbf16>, vector<16x128xf32> -> vector<16x128xf32>
    %c0_3 = arith.constant 0 : index
    %c0_4 = arith.constant 0 : index
    %4 = vector.load %arg3[%c0_3, %c0_4] : memref<1x128xf32, #tpu.memory_space<vmem>>, vector<1x128xf32>
    %5 = vector.broadcast %4 : vector<1x128xf32> to vector<16x128xf32>
    %6 = arith.addf %3, %5 : vector<16x128xf32>
    %cst_5 = arith.constant 0.000000e+00 : f32
    %7 = vector.broadcast %cst_5 : f32 to vector<16x128xf32>
    %8 = arith.maximumf %6, %7 : vector<16x128xf32>
    %9 = arith.truncf %8 : vector<16x128xf32> to vector<16x128xbf16>
    %c0_6 = arith.constant 0 : index
    %c0_7 = arith.constant 0 : index
    %10 = vector.load %arg4[%c0_6, %c0_7] : memref<128x128xbf16, #tpu.memory_space<vmem>>, vector<128x128xbf16>
    %cst_8 = arith.constant dense<0.000000e+00> : vector<16x128xf32>
    %11 = tpu.matmul %9, %10, %cst_8 {dimension_numbers = #tpu.dot_dimension_numbers<[1], [0], [0], [1], [0, 0, 1, 1], [], []>} : vector<16x128xbf16>, vector<128x128xbf16>, vector<16x128xf32> -> vector<16x128xf32>
    %c0_9 = arith.constant 0 : index
    %c0_10 = arith.constant 0 : index
    %12 = vector.load %arg5[%c0_9, %c0_10] : memref<1x128xf32, #tpu.memory_space<vmem>>, vector<1x128xf32>
    %13 = vector.broadcast %12 : vector<1x128xf32> to vector<16x128xf32>
    %14 = arith.addf %11, %13 : vector<16x128xf32>
    %cst_11 = arith.constant 0.000000e+00 : f32
    %15 = vector.broadcast %cst_11 : f32 to vector<16x128xf32>
    %16 = arith.maximumf %14, %15 : vector<16x128xf32>
    %17 = arith.truncf %16 : vector<16x128xf32> to vector<16x128xbf16>
    %c0_12 = arith.constant 0 : index
    %c0_13 = arith.constant 0 : index
    %18 = vector.load %arg6[%c0_12, %c0_13] : memref<128x128xbf16, #tpu.memory_space<vmem>>, vector<128x128xbf16>
    %cst_14 = arith.constant dense<0.000000e+00> : vector<16x128xf32>
    %19 = tpu.matmul %17, %18, %cst_14 {dimension_numbers = #tpu.dot_dimension_numbers<[1], [0], [0], [1], [0, 0, 1, 1], [], []>} : vector<16x128xbf16>, vector<128x128xbf16>, vector<16x128xf32> -> vector<16x128xf32>
    %c0_15 = arith.constant 0 : index
    %c0_16 = arith.constant 0 : index
    %20 = vector.load %arg7[%c0_15, %c0_16] : memref<1x128xf32, #tpu.memory_space<vmem>>, vector<1x128xf32>
    %21 = vector.broadcast %20 : vector<1x128xf32> to vector<16x128xf32>
    %22 = arith.addf %19, %21 : vector<16x128xf32>
    %c0_17 = arith.constant 0 : index
    %c0_18 = arith.constant 0 : index
    %23 = vector.load %arg8[%c0_17, %c0_18] : memref<16x128xf32, #tpu.memory_space<vmem>>, vector<16x128xf32>
    tpu.vector_store %arg8[%c0_17, %c0_18], %22 {strides = array<i32>} : memref<16x128xf32, #tpu.memory_space<vmem>>, vector<16x128xf32>,
    return
  }
  func.func @transform_0(%arg0: i32) -> (i32, i32) {
    %c0_i32 = arith.constant 0 : i32
    %c0_i32_0 = arith.constant 0 : i32
    return %arg0, %c0_i32 : i32, i32
  }
  func.func @transform_1(%arg0: i32) -> (i32, i32) {
    %c0_i32 = arith.constant 0 : i32
    %c0_i32_0 = arith.constant 0 : i32
    %c0_i32_1 = arith.constant 0 : i32
    return %c0_i32, %c0_i32_0 : i32, i32
  }
  func.func @transform_2(%arg0: i32) -> (i32, i32) {
    %c0_i32 = arith.constant 0 : i32
    %c0_i32_0 = arith.constant 0 : i32
    %c0_i32_1 = arith.constant 0 : i32
    return %c0_i32, %c0_i32_0 : i32, i32
  }
  func.func @transform_3(%arg0: i32) -> (i32, i32) {
    %c0_i32 = arith.constant 0 : i32
    %c0_i32_0 = arith.constant 0 : i32
    %c0_i32_1 = arith.constant 0 : i32
    return %c0_i32, %c0_i32_0 : i32, i32
  }
  func.func @transform_4(%arg0: i32) -> (i32, i32) {
    %c0_i32 = arith.constant 0 : i32
    %c0_i32_0 = arith.constant 0 : i32
    %c0_i32_1 = arith.constant 0 : i32
    return %c0_i32, %c0_i32_0 : i32, i32
  }
  func.func @transform_5(%arg0: i32) -> (i32, i32) {
    %c0_i32 = arith.constant 0 : i32
    %c0_i32_0 = arith.constant 0 : i32
    %c0_i32_1 = arith.constant 0 : i32
    return %c0_i32, %c0_i32_0 : i32, i32
  }
  func.func @transform_6(%arg0: i32) -> (i32, i32) {
    %c0_i32 = arith.constant 0 : i32
    %c0_i32_0 = arith.constant 0 : i32
    %c0_i32_1 = arith.constant 0 : i32
    return %c0_i32, %c0_i32_0 : i32, i32
  }
  func.func @transform_7(%arg0: i32) -> (i32, i32) {
    %c0_i32 = arith.constant 0 : i32
    %c0_i32_0 = arith.constant 0 : i32
    return %arg0, %c0_i32 : i32, i32
  }
}

</mosaic_0001>

<llo_original>
// kernel: mlp_g_forward.1
$region0: #{mlp_g_forward.1}
  #allocation0 [shape = 'u32[]', space=smem, size = 0x4, offset = 0x4, fixed_abs, tag = 'smem constant byte address 0x4 - core index']
  #allocation1 [shape = 'u32[144,128]{1,0:T(1,128)}', space=vmem, size = 0x12000, scoped, tag = 'internal scratch']
  %s0 = inlined_call_operand.vmem [shape: f32[16,32], index: 0, kind: input, shape index: {}]
  %s1 = inlined_call_operand.vmem [shape: bf16[32,128], index: 1, kind: input, shape index: {}]
  %s2 = inlined_call_operand.vmem [shape: f32[1,128], index: 2, kind: input, shape index: {}]
  %s3 = inlined_call_operand.vmem [shape: bf16[128,128], index: 3, kind: input, shape index: {}]
  %s4 = inlined_call_operand.vmem [shape: f32[1,128], index: 4, kind: input, shape index: {}]
  %s5 = inlined_call_operand.vmem [shape: bf16[128,128], index: 5, kind: input, shape index: {}]
  %s6 = inlined_call_operand.vmem [shape: f32[1,128], index: 6, kind: input, shape index: {}]
  %s7 = inlined_call_operand.hbm [shape: f32[16,128], index: 7, kind: output, shape index: {}]
  %s8 = sld [smem:[#allocation0]]
  $region38: #{mlp_g_forward.1} parent=0
    _
  %s10 = ssub.s32 1, %s8
  %s11 = scalar_select 0, %s10, %s8
  $region1: #{mlp_g_forward.1} parent=0
    #allocation2 [shape = 'u8[8192]{0}', space=vmem, size = 0x2000, scoped, tag = 'output window, operand 0, single buffered']
    #allocation3 [shape = 's32[1]{0}', space=sflag, size = 0x4, scoped, tag = 'scoped memory for mlp_g_forward.1']
    %12 = vsyncpa [#allocation3], 0
    // Predicated region
    $region2: #{mlp_g_forward.1} parent=1 // pred_check
      _
    $region3: #{mlp_g_forward.1} parent=1 // pred_check_branch
      %14 = sbr.rel (0) target = $region5
    $region4: #{mlp_g_forward.1} parent=1 // pred_region
      _
    $region5: #{mlp_g_forward.1} parent=1 // pred_fallthru
      _
    // Predicated region
    $region6: #{mlp_g_forward.1} parent=1 // pred_check
      _
    $region7: #{mlp_g_forward.1} parent=1 // pred_check_branch
      %16 = sbr.rel (0) target = $region9
    $region8: #{mlp_g_forward.1} parent=1 // pred_region
      _
    $region9: #{mlp_g_forward.1} parent=1 // pred_fallthru
      _
    // Predicated region
    $region10: #{mlp_g_forward.1} parent=1 // pred_check
      _
    $region11: #{mlp_g_forward.1} parent=1 // pred_check_branch
      %18 = sbr.rel (0) target = $region13
    $region12: #{mlp_g_forward.1} parent=1 // pred_region
      _
    $region13: #{mlp_g_forward.1} parent=1 // pred_fallthru
      _
    // Predicated region
    $region14: #{mlp_g_forward.1} parent=1 // pred_check
      _
    $region15: #{mlp_g_forward.1} parent=1 // pred_check_branch
      %20 = sbr.rel (0) target = $region17
    $region16: #{mlp_g_forward.1} parent=1 // pred_region
      _
    $region17: #{mlp_g_forward.1} parent=1 // pred_fallthru
      _
    // Predicated region
    $region18: #{mlp_g_forward.1} parent=1 // pred_check
      _
    $region19: #{mlp_g_forward.1} parent=1 // pred_check_branch
      %22 = sbr.rel (0) target = $region21
    $region20: #{mlp_g_forward.1} parent=1 // pred_region
      _
    $region21: #{mlp_g_forward.1} parent=1 // pred_fallthru
      _
    // Predicated region
    $region22: #{mlp_g_forward.1} parent=1 // pred_check
      _
    $region23: #{mlp_g_forward.1} parent=1 // pred_check_branch
      %24 = sbr.rel (0) target = $region25
    $region24: #{mlp_g_forward.1} parent=1 // pred_region
      _
    $region25: #{mlp_g_forward.1} parent=1 // pred_fallthru
      _
    // Predicated region
    $region26: #{mlp_g_forward.1} parent=1 // pred_check
      _
    $region27: #{mlp_g_forward.1} parent=1 // pred_check_branch
      %26 = sbr.rel (0) target = $region29
    $region28: #{mlp_g_forward.1} parent=1 // pred_region
      _
    $region29: #{mlp_g_forward.1} parent=1 // pred_fallthru
      _
    %v28 = vld [vmem:[%s0] sm:$0xff]
    %v29 = vld [vmem:[%s0 + $0x8] sm:$0xff]
    %v30 = vpack.c.bf16 %v29, %v28
    %v31 = vld [vmem:[%s1] sm:$0xf]
    %v32 = vld [vmem:[%s1 + $0x4] sm:$0xf]
    %v33 = vld [vmem:[%s1 + $0x8] sm:$0xf]
    %v34 = vld [vmem:[%s1 + $0xc] sm:$0xf]
    %v35 = vld [vmem:[%s2] sm:$0x1]
    %v37 = vlaneseq
    %v38 = vshrl.u32 %v37, 7
    %v39 = vsub.s32 0, %v38
    %v40 = vrot.slane %v35, %v39
    %v46 = vunpack.c.l.b16 %v31
    %v47 = vunpack.c.l.b16 %v32
    %v48 = vunpack.c.l.b16 %v33
    %v49 = vunpack.c.l.b16 %v34
    %v50 = vpack.c.b16 %v47, %v46
    %v51 = vpack.c.b16 %v49, %v48
    %vm54 = vcmask 261120
    %v56 = vsel %vm54, %v30, 0
    %58 = vmatprep.subr.bf16.mxu0 0
    %59 = vmatpush1.bf16.msra.mxu0 %v50
    %60 = vmatprep.subr.bf16.mxu0 0
    %61 = vmatpush1.bf16.msra.mxu0 %v51
    %62 = vmatprep.subr.bf16.mxu0 0
    %63 = vmatpush1.bf16.msra.mxu0 0
    %64 = vmatprep.subr.bf16.mxu0 0
    %65 = vmatpush1.bf16.msra.mxu0 0
    %66 = vmatprep.subr.bf16.mxu0 0
    %67 = vmatpush1.bf16.msra.mxu0 0
    %68 = vmatprep.subr.bf16.mxu0 0
    %69 = vmatpush1.bf16.msra.mxu0 0
    %70 = vmatprep.subr.bf16.mxu0 0
    %71 = vmatpush1.bf16.msra.mxu0 0
    %72 = vmatprep.subr.bf16.mxu0 0
    %73 = vmatpush1.bf16.msra.mxu0 0
    %74 = vmatprep.subr.bf16.mxu0 0
    %75 = vmatpush1.bf16.msra.mxu0 0
    %76 = vmatprep.subr.bf16.mxu0 0
    %77 = vmatpush1.bf16.msra.mxu0 0
    %78 = vmatprep.subr.bf16.mxu0 0
    %79 = vmatpush1.bf16.msra.mxu0 0
    %80 = vmatprep.subr.bf16.mxu0 0
    %81 = vmatpush1.bf16.msra.mxu0 0
    %82 = vmatprep.subr.bf16.mxu0 0
    %83 = vmatpush1.bf16.msra.mxu0 0
    %84 = vmatprep.subr.bf16.mxu0 0
    %85 = vmatpush1.bf16.msra.mxu0 0
    %86 = vmatprep.subr.bf16.mxu0 0
    %87 = vmatpush1.bf16.msra.mxu0 0
    %88 = vmatprep.subr.bf16.mxu0 0
    %89 = vmatpush1.bf16.msra.mxu0 0
    %90 = vmatprep.mubr.bf16.mxu0 0
    %91 = vmatmul.mubr.bf16.gmra.mrb[0].mxu0 %v56
    %v92 = vpop.f32.mrb[0].mxu0
    %v93 = vadd.f32 %v40, %v92
    %v94 = vpop.f32.mrb[0].mxu0
    %v95 = vpop.f32.mrb[0].mxu0
    %v96 = vadd.f32 %v40, %v95
    %v97 = vpop.f32.mrb[0].mxu0
    %98 = vdwg.mxu0
    %v99 = vmax.f32 %v93, 0.0
    %v100 = vmax.f32 %v96, 0.0
    %v101 = vpack.c.bf16 %v100, %v99
    %v102 = vld [vmem:[%s3] sm:$0xf]
    %v103 = vld [vmem:[%s3 + $0x4] sm:$0xf]
    %v104 = vld [vmem:[%s3 + $0x8] sm:$0xf]
    %v105 = vld [vmem:[%s3 + $0xc] sm:$0xf]
    %v106 = vld [vmem:[%s3 + $0x10] sm:$0xf]
    %v107 = vld [vmem:[%s3 + $0x14] sm:$0xf]
    %v108 = vld [vmem:[%s3 + $0x18] sm:$0xf]
    %v109 = vld [vmem:[%s3 + $0x1c] sm:$0xf]
    %v110 = vld [vmem:[%s3 + $0x20] sm:$0xf]
    %v111 = vld [vmem:[%s3 + $0x24] sm:$0xf]
    %v112 = vld [vmem:[%s3 + $0x28] sm:$0xf]
    %v113 = vld [vmem:[%s3 + $0x2c] sm:$0xf]
    %v114 = vld [vmem:[%s3 + $0x30] sm:$0xf]
    %v115 = vld [vmem:[%s3 + $0x34] sm:$0xf]
    %v116 = vld [vmem:[%s3 + $0x38] sm:$0xf]
    %v117 = vld [vmem:[%s3 + $0x3c] sm:$0xf]
    %v118 = vld [vmem:[%s4] sm:$0x1]
    %v120 = vlaneseq
    %v121 = vshrl.u32 %v120, 7
    %v122 = vsub.s32 0, %v121
    %v123 = vrot.slane %v118, %v122
    %v141 = vunpack.c.l.b16 %v102
    %v142 = vunpack.c.l.b16 %v103
    %v143 = vunpack.c.l.b16 %v104
    %v144 = vunpack.c.l.b16 %v105
    %v145 = vunpack.c.l.b16 %v106
    %v146 = vunpack.c.l.b16 %v107
    %v147 = vunpack.c.l.b16 %v108
    %v148 = vunpack.c.l.b16 %v109
    %v149 = vunpack.c.l.b16 %v110
    %v150 = vunpack.c.l.b16 %v111
    %v151 = vunpack.c.l.b16 %v112
    %v152 = vunpack.c.l.b16 %v113
    %v153 = vunpack.c.l.b16 %v114
    %v154 = vunpack.c.l.b16 %v115
    %v155 = vunpack.c.l.b16 %v116
    %v156 = vunpack.c.l.b16 %v117
    %v157 = vpack.c.b16 %v142, %v141
    %v158 = vpack.c.b16 %v144, %v143
    %v159 = vpack.c.b16 %v146, %v145
    %v160 = vpack.c.b16 %v148, %v147
    %v161 = vpack.c.b16 %v150, %v149
    %v162 = vpack.c.b16 %v152, %v151
    %v163 = vpack.c.b16 %v154, %v153
    %v164 = vpack.c.b16 %v156, %v155
    %173 = vmatprep.subr.bf16.mxu0 0
    %174 = vmatpush1.bf16.msra.mxu0 %v157
    %175 = vmatprep.subr.bf16.mxu0 0
    %176 = vmatpush1.bf16.msra.mxu0 %v158
    %177 = vmatprep.subr.bf16.mxu0 0
    %178 = vmatpush1.bf16.msra.mxu0 %v159
    %179 = vmatprep.subr.bf16.mxu0 0
    %180 = vmatpush1.bf16.msra.mxu0 %v160
    %181 = vmatprep.subr.bf16.mxu0 0
    %182 = vmatpush1.bf16.msra.mxu0 %v161
    %183 = vmatprep.subr.bf16.mxu0 0
    %184 = vmatpush1.bf16.msra.mxu0 %v162
    %185 = vmatprep.subr.bf16.mxu0 0
    %186 = vmatpush1.bf16.msra.mxu0 %v163
    %187 = vmatprep.subr.bf16.mxu0 0
    %188 = vmatpush1.bf16.msra.mxu0 %v164
    %189 = vmatprep.subr.bf16.mxu0 0
    %190 = vmatpush1.bf16.msra.mxu0 0
    %191 = vmatprep.subr.bf16.mxu0 0
    %192 = vmatpush1.bf16.msra.mxu0 0
    %193 = vmatprep.subr.bf16.mxu0 0
    %194 = vmatpush1.bf16.msra.mxu0 0
    %195 = vmatprep.subr.bf16.mxu0 0
    %196 = vmatpush1.bf16.msra.mxu0 0
    %197 = vmatprep.subr.bf16.mxu0 0
    %198 = vmatpush1.bf16.msra.mxu0 0
    %199 = vmatprep.subr.bf16.mxu0 0
    %200 = vmatpush1.bf16.msra.mxu0 0
    %201 = vmatprep.subr.bf16.mxu0 0
    %202 = vmatpush1.bf16.msra.mxu0 0
    %203 = vmatprep.subr.bf16.mxu0 0
    %204 = vmatpush1.bf16.msra.mxu0 0
    %205 = vmatprep.mubr.bf16.mxu0 0
    %206 = vmatmul.mubr.bf16.gmra.mrb[0].mxu0 %v101
    %v207 = vpop.f32.mrb[0].mxu0
    %v208 = vadd.f32 %v123, %v207
    %v209 = vpop.f32.mrb[0].mxu0
    %v210 = vpop.f32.mrb[0].mxu0
    %v211 = vadd.f32 %v123, %v210
    %v212 = vpop.f32.mrb[0].mxu0
    %213 = vdwg.mxu0
    %v214 = vmax.f32 %v208, 0.0
    %v215 = vmax.f32 %v211, 0.0
    %v216 = vpack.c.bf16 %v215, %v214
    %v217 = vld [vmem:[%s5] sm:$0xf]
    %v218 = vld [vmem:[%s5 + $0x4] sm:$0xf]
    %v219 = vld [vmem:[%s5 + $0x8] sm:$0xf]
    %v220 = vld [vmem:[%s5 + $0xc] sm:$0xf]
    %v221 = vld [vmem:[%s5 + $0x10] sm:$0xf]
    %v222 = vld [vmem:[%s5 + $0x14] sm:$0xf]
    %v223 = vld [vmem:[%s5 + $0x18] sm:$0xf]
    %v224 = vld [vmem:[%s5 + $0x1c] sm:$0xf]
    %v225 = vld [vmem:[%s5 + $0x20] sm:$0xf]
    %v226 = vld [vmem:[%s5 + $0x24] sm:$0xf]
    %v227 = vld [vmem:[%s5 + $0x28] sm:$0xf]
    %v228 = vld [vmem:[%s5 + $0x2c] sm:$0xf]
    %v229 = vld [vmem:[%s5 + $0x30] sm:$0xf]
    %v230 = vld [vmem:[%s5 + $0x34] sm:$0xf]
    %v231 = vld [vmem:[%s5 + $0x38] sm:$0xf]
    %v232 = vld [vmem:[%s5 + $0x3c] sm:$0xf]
    %v233 = vld [vmem:[%s6] sm:$0x1]
    %v235 = vlaneseq
    %v236 = vshrl.u32 %v235, 7
    %v237 = vsub.s32 0, %v236
    %v238 = vrot.slane %v233, %v237
    %v256 = vunpack.c.l.b16 %v217
    %v257 = vunpack.c.l.b16 %v218
    %v258 = vunpack.c.l.b16 %v219
    %v259 = vunpack.c.l.b16 %v220
    %v260 = vunpack.c.l.b16 %v221
    %v261 = vunpack.c.l.b16 %v222
    %v262 = vunpack.c.l.b16 %v223
    %v263 = vunpack.c.l.b16 %v224
    %v264 = vunpack.c.l.b16 %v225
    %v265 = vunpack.c.l.b16 %v226
    %v266 = vunpack.c.l.b16 %v227
    %v267 = vunpack.c.l.b16 %v228
    %v268 = vunpack.c.l.b16 %v229
    %v269 = vunpack.c.l.b16 %v230
    %v270 = vunpack.c.l.b16 %v231
    %v271 = vunpack.c.l.b16 %v232
    %v272 = vpack.c.b16 %v257, %v256
    %v273 = vpack.c.b16 %v259, %v258
    %v274 = vpack.c.b16 %v261, %v260
    %v275 = vpack.c.b16 %v263, %v262
    %v276 = vpack.c.b16 %v265, %v264
    %v277 = vpack.c.b16 %v267, %v266
    %v278 = vpack.c.b16 %v269, %v268
    %v279 = vpack.c.b16 %v271, %v270
    %288 = vmatprep.subr.bf16.mxu0 0
    %289 = vmatpush1.bf16.msra.mxu0 %v272
    %290 = vmatprep.subr.bf16.mxu0 0
    %291 = vmatpush1.bf16.msra.mxu0 %v273
    %292 = vmatprep.subr.bf16.mxu0 0
    %293 = vmatpush1.bf16.msra.mxu0 %v274
    %294 = vmatprep.subr.bf16.mxu0 0
    %295 = vmatpush1.bf16.msra.mxu0 %v275
    %296 = vmatprep.subr.bf16.mxu0 0
    %297 = vmatpush1.bf16.msra.mxu0 %v276
    %298 = vmatprep.subr.bf16.mxu0 0
    %299 = vmatpush1.bf16.msra.mxu0 %v277
    %300 = vmatprep.subr.bf16.mxu0 0
    %301 = vmatpush1.bf16.msra.mxu0 %v278
    %302 = vmatprep.subr.bf16.mxu0 0
    %303 = vmatpush1.bf16.msra.mxu0 %v279
    %304 = vmatprep.subr.bf16.mxu0 0
    %305 = vmatpush1.bf16.msra.mxu0 0
    %306 = vmatprep.subr.bf16.mxu0 0
    %307 = vmatpush1.bf16.msra.mxu0 0
    %308 = vmatprep.subr.bf16.mxu0 0
    %309 = vmatpush1.bf16.msra.mxu0 0
    %310 = vmatprep.subr.bf16.mxu0 0
    %311 = vmatpush1.bf16.msra.mxu0 0
    %312 = vmatprep.subr.bf16.mxu0 0
    %313 = vmatpush1.bf16.msra.mxu0 0
    %314 = vmatprep.subr.bf16.mxu0 0
    %315 = vmatpush1.bf16.msra.mxu0 0
    %316 = vmatprep.subr.bf16.mxu0 0
    %317 = vmatpush1.bf16.msra.mxu0 0
    %318 = vmatprep.subr.bf16.mxu0 0
    %319 = vmatpush1.bf16.msra.mxu0 0
    %320 = vmatprep.mubr.bf16.mxu0 0
    %321 = vmatmul.mubr.bf16.gmra.mrb[0].mxu0 %v216
    %v322 = vpop.f32.mrb[0].mxu0
    %v323 = vadd.f32 %v238, %v322
    %v324 = vpop.f32.mrb[0].mxu0
    %v325 = vpop.f32.mrb[0].mxu0
    %v326 = vadd.f32 %v238, %v325
    %v327 = vpop.f32.mrb[0].mxu0
    %328 = vdwg.mxu0
    %329 = vst [vmem:[#allocation2] sm:$0xff] %v323
    %330 = vst [vmem:[#allocation2 + $0x8] sm:$0xff] %v326
    // Predicated region
    $region30: #{mlp_g_forward.1} parent=1 // pred_check
      _
    $region31: #{mlp_g_forward.1} parent=1 // pred_check_branch
      %332 = sbr.rel (0) target = $region33
    $region32: #{mlp_g_forward.1} parent=1 // pred_region
      %s334 = ssub.s32 256, 256
      %335 = vsyncadd [#allocation3], %s334
      %s336 = sshll.u32 [#allocation2], 4
      %s337 = int_to_ptr.vmem [resolvable:$true] %s336
      %342 = dma.vmem_to_hbm [thread:$0]  %s337, 256, %s7, [#allocation3], 128, 128, 8
    $region33: #{mlp_g_forward.1} parent=1 // pred_fallthru
      _
    // Predicated region
    $region34: #{mlp_g_forward.1} parent=1 // pred_check
      _
    $region35: #{mlp_g_forward.1} parent=1 // pred_check_branch
      %344 = sbr.rel (0) target = $region37
    $region36: #{mlp_g_forward.1} parent=1 // pred_region
      %345 = dma.done [#allocation3], 256
    $region37: #{mlp_g_forward.1} parent=1 // pred_fallthru
      _
    %346 = vsyncpa [#allocation3], 1

</llo_original>
